<compile_context>
chip_gen: v7x
topology: tpu7x:2x2x1
jax: 0.10.0
libtpu: 0.0.40
codegen_flags: <defaults>
</compile_context>

<pallas_src>
import functools

import jax
import jax.numpy as jnp
from jax.experimental import pallas as pl
from jax.experimental.pallas import tpu as pltpu


# ---------------------------------------------------------------------------
# tiling helpers
# ---------------------------------------------------------------------------

_STATS_BLOCK_BYTES = 8 * 1024 * 1024   # x bytes per block, stats pass (read only)
_APPLY_BLOCK_BYTES = 4 * 1024 * 1024   # x bytes per block, apply pass (read+write)


def _sublane(itemsize):
    # minimum second-to-last-dim tile for the packed dtype (f32 / bf16,f16 / i8)
    return {4: 8, 2: 16, 1: 32}.get(itemsize, 8)


def _choose_tiles(N, C, HW, itemsize, target_bytes):
    """Pick (nb, tc, thw): nb divides N exactly; tc/thw are sublane/lane
    aligned or full-extent; block bytes ~= target_bytes."""
    sub = _sublane(itemsize)
    target_elems = max(sub * 128, target_bytes // itemsize)

    # lane (HW) tile: full extent if affordable, else largest 128-multiple.
    max_thw = max(128, (target_elems // sub) // 128 * 128)
    thw = HW if HW <= max_thw else max_thw

    # channel (sublane) tile.
    rem = max(1, target_elems // thw)
    if C <= max(sub, rem):
        tc = C                                   # full extent (always legal)
    else:
        tc = max(sub, (rem // sub) * sub)        # multiple of the sublane tile

    # batch blocking: largest divisor of N within the remaining budget.
    rem_n = max(1, target_elems // (thw * tc))
    nb = 1
    for d in range(min(N, rem_n), 0, -1):
        if N % d == 0:
            nb = d
            break
    return nb, tc, thw


def _vmem_limit(bytes_live):
    # live double-buffered bytes + margin; >= scoped defaults, safe on all chips
    return int(min(96 << 20, max(32 << 20, bytes_live + (4 << 20))))


# ---------------------------------------------------------------------------
# pass 1: per-channel partial sums of (x - running_mean) and its square
# ---------------------------------------------------------------------------

def _stats_kernel(x_ref, rm_ref, s1_ref, s2_ref, *, hw_total, thw, mask_hw):
    # x_ref  : (nb, tc, thw) block of the (N, C, HW) view, storage dtype
    # rm_ref : (tc, 1) running mean (f32), used as a numerical shift
    # s1/s2  : (1, tc, 1) VMEM-resident accumulators (resident across hw axis)
    @pl.when(pl.program_id(2) == 0)
    def _init():
        s1_ref[...] = jnp.zeros_like(s1_ref)
        s2_ref[...] = jnp.zeros_like(s2_ref)

    x = x_ref[...].astype(jnp.float32)               # upcast per-vreg (v5e: no bf16 VALU)
    xc = x - rm_ref[...][None, :, :]                 # shifted-variance accumulation
    if mask_hw:
        hw0 = pl.program_id(2) * thw
        lane = jax.lax.broadcasted_iota(jnp.int32, xc.shape, dimension=2)
        xc = jnp.where(hw0 + lane < hw_total, xc, 0.0)   # zero padded lanes
    s1_ref[...] += jnp.sum(xc, axis=(0, 2), keepdims=True)
    s2_ref[...] += jnp.sum(xc * xc, axis=(0, 2), keepdims=True)


def _channel_partial_sums(x3, rm, nb, tc, thw):
    N, C, HW = x3.shape
    n_blocks = N // nb
    c_blocks = pl.cdiv(C, tc)
    hw_blocks = pl.cdiv(HW, thw)
    mask_hw = (HW % thw) != 0
    block_bytes = nb * tc * thw * x3.dtype.itemsize
    kernel = functools.partial(_stats_kernel, hw_total=HW, thw=thw, mask_hw=mask_hw)
    return pl.pallas_call(
        kernel,
        out_shape=(
            jax.ShapeDtypeStruct((n_blocks, C, 1), jnp.float32),
            jax.ShapeDtypeStruct((n_blocks, C, 1), jnp.float32),
        ),
        grid=(n_blocks, c_blocks, hw_blocks),
        in_specs=[
            pl.BlockSpec((nb, tc, thw), lambda n, c, h: (n, c, h)),
            pl.BlockSpec((tc, 1), lambda n, c, h: (c, 0)),
        ],
        out_specs=(
            pl.BlockSpec((1, tc, 1), lambda n, c, h: (n, c, 0)),
            pl.BlockSpec((1, tc, 1), lambda n, c, h: (n, c, 0)),
        ),
        compiler_params=pltpu.CompilerParams(
            dimension_semantics=("parallel", "parallel", "arbitrary"),
            vmem_limit_bytes=_vmem_limit(2 * block_bytes)),
    )(x3, rm)


# ---------------------------------------------------------------------------
# pass 2: fused per-channel affine  y = x * scale + bias   (output in x.dtype)
# ---------------------------------------------------------------------------

def _apply_kernel(x_ref, scale_ref, bias_ref, y_ref):
    x = x_ref[...].astype(jnp.float32)               # (nb, tc, thw)
    y = x * scale_ref[...][None, :, :] + bias_ref[...][None, :, :]
    y_ref[...] = y.astype(y_ref.dtype)


def _apply_affine(x3, scale, bias, nb, tc, thw):
    N, C, HW = x3.shape
    n_blocks = N // nb
    c_blocks = pl.cdiv(C, tc)
    hw_blocks = pl.cdiv(HW, thw)
    block_bytes = nb * tc * thw * x3.dtype.itemsize
    return pl.pallas_call(
        _apply_kernel,
        out_shape=jax.ShapeDtypeStruct((N, C, HW), x3.dtype),
        grid=(n_blocks, c_blocks, hw_blocks),
        in_specs=[
            pl.BlockSpec((nb, tc, thw), lambda n, c, h: (n, c, h)),
            pl.BlockSpec((tc, 1), lambda n, c, h: (c, 0)),
            pl.BlockSpec((tc, 1), lambda n, c, h: (c, 0)),
        ],
        out_specs=pl.BlockSpec((nb, tc, thw), lambda n, c, h: (n, c, h)),
        compiler_params=pltpu.CompilerParams(
            dimension_semantics=("parallel", "parallel", "parallel"),
            vmem_limit_bytes=_vmem_limit(4 * block_bytes)),
    )(x3, scale, bias)


# ---------------------------------------------------------------------------
# full forward (training + eval), matching BatchRenorm2D.forward semantics
# ---------------------------------------------------------------------------

def _bump_max(val, inc, cap):
    """r_max/d_max update that works for Python floats and traced scalars."""
    if isinstance(val, (bool, int, float)):
        return val + inc if val < cap else val
    return jnp.where(val < cap, val + inc, val)


def batch_renorm2d_forward(x, gamma, beta, running_mean, running_std, *,
                           eps=1e-5, momentum=0.01,
                           r_max=1.0, d_max=0.0,
                           r_max_inc_step=1e-4, d_max_inc_step=1e-4,
                           max_r_max=3.0, max_d_max=5.0,
                           training=True,
                           stats_block_bytes=_STATS_BLOCK_BYTES,
                           apply_block_bytes=_APPLY_BLOCK_BYTES):
    """BatchRenorm2D forward.

    x: (N, C, H, W) in any float dtype; gamma/beta/running_mean/running_std: (C,).
    Returns (y, new_running_mean, new_running_std, new_r_max, new_d_max).
    In eval mode the state is returned unchanged.  y has x's dtype.
    """
    N, C, H, W = x.shape
    HW = H * W
    x3 = x.reshape(N, C, HW)                    # pure view; keeps storage dtype
    itemsize = x.dtype.itemsize

    g = gamma.reshape(C, 1).astype(jnp.float32)
    b = beta.reshape(C, 1).astype(jnp.float32)
    rm = running_mean.reshape(C, 1).astype(jnp.float32)
    rs = running_std.reshape(C, 1).astype(jnp.float32)

    if training:
        # ---- pass 1: per-channel shifted sum / sumsq (one sweep) ------------
        nb, tc, thw = _choose_tiles(N, C, HW, itemsize, stats_block_bytes)
        s1p, s2p = _channel_partial_sums(x3, rm, nb, tc, thw)
        s1 = jnp.sum(s1p, axis=0)               # (C, 1)
        s2 = jnp.sum(s2p, axis=0)
        cnt = jnp.float32(N * HW)
        mean_c = s1 / cnt                       # E[x - rm]
        mean = rm + mean_c
        var = jnp.maximum(s2 / cnt - mean_c * mean_c, 0.0)   # shifted, well-conditioned
        std = jnp.sqrt(var + eps)

        # r/d corrections (constants wrt grad, like torch .data)
        r = jnp.clip(std / rs, 1.0 / r_max, r_max)
        d = jnp.clip(mean_c / rs, -d_max, d_max)   # (mean - rm)/rs

        # Fold normalize + affine into a single per-channel scale/bias:
        #   y = gamma*((x - mean)*r/std + d) + beta
        #     = x*(gamma*r/std) + (gamma*(d - mean*r/std) + beta)
        rc = r * (1.0 / std)
        scale = g * rc
        bias = g * (d - mean * rc) + b
    else:
        # eval: y = gamma*(x - running_mean)/running_std + beta
        scale = g / rs
        bias = b - g * rm / rs

    # ---- pass 2: fused elementwise apply, output in x.dtype ------------------
    nb, tc, thw = _choose_tiles(N, C, HW, itemsize, apply_block_bytes)
    y = _apply_affine(x3, scale, bias, nb, tc, thw).reshape(N, C, H, W)

    if not training:
        return y, running_mean, running_std, r_max, d_max

    # stateful bookkeeping (tiny-vector JAX; module mutates buffers in place)
    new_running_mean = (rm + momentum * (mean - rm)).reshape(C)
    new_running_std = (rs + momentum * (std - rs)).reshape(C)
    new_r_max = _bump_max(r_max, r_max_inc_step * N, max_r_max)
    new_d_max = _bump_max(d_max, d_max_inc_step * N, max_d_max)
    # TODO(synk): the torch module mutates self.running_* / r_max / d_max in place;
    # here the updated state is returned functionally instead.
    return y, new_running_mean, new_running_std, new_r_max, new_d_max


# ---------------------------------------------------------------------------
# pure-JAX reference (mirrors the PyTorch forward)
# ---------------------------------------------------------------------------

def _reference(x, gamma, beta, running_mean, running_std, eps, r_max, d_max,
               training=True):
    xf = x.astype(jnp.float32)
    mean = jnp.mean(xf, axis=(0, 2, 3), keepdims=True)
    var = jnp.var(xf, axis=(0, 2, 3), keepdims=True)   # unbiased=False
    std = jnp.sqrt(var + eps)
    rm = running_mean.reshape(1, -1, 1, 1)
    rs = running_std.reshape(1, -1, 1, 1)
    g = gamma.reshape(1, -1, 1, 1)
    b = beta.reshape(1, -1, 1, 1)
    if training:
        r = jnp.clip(std / rs, 1.0 / r_max, r_max)
        d = jnp.clip((mean - rm) / rs, -d_max, d_max)
        y = (xf - mean) * r / std + d
    else:
        y = (xf - rm) / rs
    return g * y + b


if __name__ == "__main__":
    key = jax.random.PRNGKey(0)
    N, C, H, W = 2, 4, 16, 16
    x = jax.random.normal(key, (N, C, H, W), dtype=jnp.float32) * 2.0 + 0.5

    gamma = 1.0 + 0.1 * jnp.arange(C, dtype=jnp.float32)
    beta = 0.05 * jnp.arange(C, dtype=jnp.float32)
    running_mean = 0.1 * jnp.arange(C, dtype=jnp.float32)
    running_var = 1.0 + 0.2 * jnp.arange(C, dtype=jnp.float32)
    running_std = jnp.sqrt(running_var)
    eps, momentum = 1e-5, 0.01

    # Case 1: module defaults (r_max=1, d_max=0) -> renorm correction inert.
    y1, rm1, rs1, _, _ = batch_renorm2d_forward(
        x, gamma, beta, running_mean, running_std,
        eps=eps, momentum=momentum, r_max=1.0, d_max=0.0)

    # Case 2: r_max>1, d_max>0 -> exercises the clip(r)/clip(d) path.
    y2, _, _, _, _ = batch_renorm2d_forward(
        x, gamma, beta, running_mean, running_std,
        eps=eps, momentum=momentum, r_max=2.0, d_max=1.0)

    # Case 3: eval mode.
    y3, _, _, _, _ = batch_renorm2d_forward(
        x, gamma, beta, running_mean, running_std,
        eps=eps, momentum=momentum, training=False)

    # Case 4: awkward non-divisible shape with tiny block budget to exercise
    # cdiv grids, HW-edge masking, C-edge padding and n-partial accumulation.
    N4, C4, H4, W4 = 2, 12, 40, 40
    x4 = jax.random.normal(jax.random.PRNGKey(1), (N4, C4, H4, W4),
                           dtype=jnp.float32) * 1.5 - 0.25
    g4 = 1.0 + 0.05 * jnp.arange(C4, dtype=jnp.float32)
    b4 = 0.02 * jnp.arange(C4, dtype=jnp.float32)
    rm4 = 0.05 * jnp.arange(C4, dtype=jnp.float32) - 0.2
    rs4 = jnp.sqrt(0.5 + 0.1 * jnp.arange(C4, dtype=jnp.float32))
    y4, _, _, _, _ = batch_renorm2d_forward(
        x4, g4, b4, rm4, rs4, eps=eps, momentum=momentum, r_max=2.0, d_max=1.0,
        stats_block_bytes=32 * 1024, apply_block_bytes=32 * 1024)

    # Case 5: native bf16 I/O (eval mode), output stays bf16.
    x_bf = x.astype(jnp.bfloat16)
    y5, _, _, _, _ = batch_renorm2d_forward(
        x_bf, gamma, beta, running_mean, running_std,
        eps=eps, momentum=momentum, training=False)

    jax.block_until_ready((y1, y2, y3, y4, y5, rm1, rs1))

    ref1 = _reference(x, gamma, beta, running_mean, running_std, eps, 1.0, 0.0)
    ref2 = _reference(x, gamma, beta, running_mean, running_std, eps, 2.0, 1.0)
    ref3 = _reference(x, gamma, beta, running_mean, running_std, eps, 1.0, 0.0,
                      training=False)
    ref4 = _reference(x4, g4, b4, rm4, rs4, eps, 2.0, 1.0)
    ref5 = _reference(x_bf, gamma, beta, running_mean, running_std, eps, 1.0, 0.0,
                      training=False)

    assert jnp.allclose(y1, ref1, atol=1e-4, rtol=1e-4), "train (r=1,d=0) mismatch"
    assert jnp.allclose(y2, ref2, atol=1e-4, rtol=1e-4), "train (r>1,d>0) mismatch"
    assert jnp.allclose(y3, ref3, atol=1e-4, rtol=1e-4), "eval mismatch"
    assert jnp.allclose(y4, ref4, atol=1e-4, rtol=1e-4), "tiled/masked shape mismatch"
    assert y5.dtype == jnp.bfloat16, "bf16 output dtype mismatch"
    assert jnp.allclose(y5.astype(jnp.float32), ref5, atol=1e-1, rtol=5e-2), \
        "bf16 eval mismatch"

    # running-stat update check (case 1)
    mean_ref = jnp.mean(x, axis=(0, 2, 3))
    std_ref = jnp.sqrt(jnp.var(x, axis=(0, 2, 3)) + eps)
    exp_rm = running_mean + momentum * (mean_ref - running_mean)
    exp_rs = running_std + momentum * (std_ref - running_std)
    assert jnp.allclose(rm1, exp_rm, atol=1e-4, rtol=1e-4), "running mean mismatch"
    assert jnp.allclose(rs1, exp_rs, atol=1e-4, rtol=1e-4), "running std mismatch"

    print("KERNEL_OK")
</pallas_src>

<mosaic_0001>
module attributes {stable_mosaic.version = 11 : i64} {
  func.func @_stats_kernel(%arg0: i32, %arg1: i32, %arg2: i32, %arg3: memref<2x4x256xf32, #tpu.memory_space<vmem>>, %arg4: memref<4x1xf32, #tpu.memory_space<vmem>>, %arg5: memref<1x4x1xf32, #tpu.memory_space<vmem>>, %arg6: memref<1x4x1xf32, #tpu.memory_space<vmem>>) attributes {dimension_semantics = [#tpu.dimension_semantics<parallel>, #tpu.dimension_semantics<parallel>, #tpu.dimension_semantics<arbitrary>], iteration_bounds = array<i64: 1, 1, 1>, scalar_prefetch = 0 : i64, scratch_operands = 0 : i64, tpu.core_type = #tpu.core_type<tc>, window_params = [{transform_indices = @transform_0, window_bounds = array<i64: 2, 4, 256>}, {transform_indices = @transform_1, window_bounds = array<i64: 4, 1>}, {transform_indices = @transform_2, window_bounds = array<i64: 1, 4, 1>}, {transform_indices = @transform_3, window_bounds = array<i64: 1, 4, 1>}]} {
    %c0_i32 = arith.constant 0 : i32
    %0 = arith.cmpi eq, %arg2, %c0_i32 : i32
    %1 = arith.extui %0 : i1 to i32
    %c0_i32_0 = arith.constant 0 : i32
    %2 = arith.cmpi ne, %1, %c0_i32_0 : i32
    scf.if %2 {
      %cst_18 = arith.constant 0.000000e+00 : f32
      %19 = vector.broadcast %cst_18 : f32 to vector<1x4x1xf32>
      %c0_19 = arith.constant 0 : index
      %c0_20 = arith.constant 0 : index
      %c0_21 = arith.constant 0 : index
      %20 = vector.load %arg5[%c0_19, %c0_20, %c0_21] : memref<1x4x1xf32, #tpu.memory_space<vmem>>, vector<1x4x1xf32>
      tpu.vector_store %arg5[%c0_19, %c0_20, %c0_21], %19 {strides = array<i32>} : memref<1x4x1xf32, #tpu.memory_space<vmem>>, vector<1x4x1xf32>,
      %cst_22 = arith.constant 0.000000e+00 : f32
      %21 = vector.broadcast %cst_22 : f32 to vector<1x4x1xf32>
      %c0_23 = arith.constant 0 : index
      %c0_24 = arith.constant 0 : index
      %c0_25 = arith.constant 0 : index
      %22 = vector.load %arg6[%c0_23, %c0_24, %c0_25] : memref<1x4x1xf32, #tpu.memory_space<vmem>>, vector<1x4x1xf32>
      tpu.vector_store %arg6[%c0_23, %c0_24, %c0_25], %21 {strides = array<i32>} : memref<1x4x1xf32, #tpu.memory_space<vmem>>, vector<1x4x1xf32>,
    } else {
    }
    %c0 = arith.constant 0 : index
    %c0_1 = arith.constant 0 : index
    %c0_2 = arith.constant 0 : index
    %3 = vector.load %arg3[%c0, %c0_1, %c0_2] : memref<2x4x256xf32, #tpu.memory_space<vmem>>, vector<2x4x256xf32>
    %c0_3 = arith.constant 0 : index
    %c0_4 = arith.constant 0 : index
    %4 = vector.load %arg4[%c0_3, %c0_4] : memref<4x1xf32, #tpu.memory_space<vmem>>, vector<4x1xf32>
    %5 = vector.shape_cast %4 : vector<4x1xf32> to vector<1x4x1xf32>
    %6 = vector.broadcast %5 : vector<1x4x1xf32> to vector<2x4x256xf32>
    %7 = arith.subf %3, %6 : vector<2x4x256xf32>
    %c0_5 = arith.constant 0 : index
    %c0_6 = arith.constant 0 : index
    %c0_7 = arith.constant 0 : index
    %8 = vector.load %arg5[%c0_5, %c0_6, %c0_7] : memref<1x4x1xf32, #tpu.memory_space<vmem>>, vector<1x4x1xf32>
    %cst = arith.constant dense<0.000000e+00> : vector<4xf32>
    %9 = vector.multi_reduction <add>, %7, %cst [0, 2] : vector<2x4x256xf32> to vector<4xf32>
    %10 = vector.shape_cast %9 : vector<4xf32> to vector<1x4x1xf32>
    %11 = arith.addf %8, %10 : vector<1x4x1xf32>
    %c0_8 = arith.constant 0 : index
    %c0_9 = arith.constant 0 : index
    %c0_10 = arith.constant 0 : index
    %12 = vector.load %arg5[%c0_8, %c0_9, %c0_10] : memref<1x4x1xf32, #tpu.memory_space<vmem>>, vector<1x4x1xf32>
    tpu.vector_store %arg5[%c0_8, %c0_9, %c0_10], %11 {strides = array<i32>} : memref<1x4x1xf32, #tpu.memory_space<vmem>>, vector<1x4x1xf32>,
    %c0_11 = arith.constant 0 : index
    %c0_12 = arith.constant 0 : index
    %c0_13 = arith.constant 0 : index
    %13 = vector.load %arg6[%c0_11, %c0_12, %c0_13] : memref<1x4x1xf32, #tpu.memory_space<vmem>>, vector<1x4x1xf32>
    %14 = arith.mulf %7, %7 : vector<2x4x256xf32>
    %cst_14 = arith.constant dense<0.000000e+00> : vector<4xf32>
    %15 = vector.multi_reduction <add>, %14, %cst_14 [0, 2] : vector<2x4x256xf32> to vector<4xf32>
    %16 = vector.shape_cast %15 : vector<4xf32> to vector<1x4x1xf32>
    %17 = arith.addf %13, %16 : vector<1x4x1xf32>
    %c0_15 = arith.constant 0 : index
    %c0_16 = arith.constant 0 : index
    %c0_17 = arith.constant 0 : index
    %18 = vector.load %arg6[%c0_15, %c0_16, %c0_17] : memref<1x4x1xf32, #tpu.memory_space<vmem>>, vector<1x4x1xf32>
    tpu.vector_store %arg6[%c0_15, %c0_16, %c0_17], %17 {strides = array<i32>} : memref<1x4x1xf32, #tpu.memory_space<vmem>>, vector<1x4x1xf32>,
    return
  }
  func.func @transform_0(%arg0: i32, %arg1: i32, %arg2: i32) -> (i32, i32, i32) {
    %c0_i32 = arith.constant 0 : i32
    return %arg0, %arg1, %arg2 : i32, i32, i32
  }
  func.func @transform_1(%arg0: i32, %arg1: i32, %arg2: i32) -> (i32, i32) {
    %c0_i32 = arith.constant 0 : i32
    %c0_i32_0 = arith.constant 0 : i32
    return %arg1, %c0_i32 : i32, i32
  }
  func.func @transform_2(%arg0: i32, %arg1: i32, %arg2: i32) -> (i32, i32, i32) {
    %c0_i32 = arith.constant 0 : i32
    %c0_i32_0 = arith.constant 0 : i32
    return %arg0, %arg1, %c0_i32 : i32, i32, i32
  }
  func.func @transform_3(%arg0: i32, %arg1: i32, %arg2: i32) -> (i32, i32, i32) {
    %c0_i32 = arith.constant 0 : i32
    %c0_i32_0 = arith.constant 0 : i32
    return %arg0, %arg1, %c0_i32 : i32, i32, i32
  }
}

</mosaic_0001>

<llo_original>
// kernel: tpu_custom_call.1
$region0: #{tpu_custom_call.1}
  #allocation0 [shape = 'u32[]', space=smem, size = 0x4, offset = 0x4, fixed_abs, tag = 'smem constant byte address 0x4 - core index']
  #allocation1 [shape = 'u32[144,128]{1,0:T(1,128)}', space=vmem, size = 0x12000, scoped, tag = 'internal scratch']
  %s0 = inlined_call_operand.hbm [shape: f32[2,4,256], index: 0, kind: input, shape index: {}]
  %s1 = inlined_call_operand.vmem [shape: f32[4,1], index: 1, kind: input, shape index: {}]
  %s2 = inlined_call_operand.vmem [shape: f32[1,4,1], index: 2, kind: output, shape index: {0}]
  %s3 = inlined_call_operand.vmem [shape: f32[1,4,1], index: 3, kind: output, shape index: {1}]
  %4 = xla_tuple %s2, %s3
  %s5 = sld [smem:[#allocation0]]
  $region34: #{tpu_custom_call.1} parent=0
    _
  %s7 = ssub.s32 1, %s5
  %s8 = scalar_select 0, %s7, %s5
  $region1: #{tpu_custom_call.1} parent=0
    #allocation2 [shape = 'u8[8192]{0}', space=vmem, size = 0x2000, scoped, tag = 'input window, operand 0, single buffered']
    #allocation3 [shape = 's32[1]{0}', space=sflag, size = 0x4, scoped, tag = 'scoped memory for tpu_custom_call.1']
    %9 = vsyncpa [#allocation3], 0
    // Predicated region
    $region2: #{tpu_custom_call.1} parent=1 // pred_check
      _
    $region3: #{tpu_custom_call.1} parent=1 // pred_check_branch
      %11 = sbr.rel (0) target = $region5
    $region4: #{tpu_custom_call.1} parent=1 // pred_region
      %s13 = ssub.s32 256, 256
      %14 = vsyncadd [#allocation3], %s13
      %s15 = sshll.u32 [#allocation2], 4
      %s16 = int_to_ptr.vmem [resolvable:$true] %s15
      %21 = dma.hbm_to_vmem [thread:$0]  %s0, 256, %s16, [#allocation3], 128, 128, 8
    $region5: #{tpu_custom_call.1} parent=1 // pred_fallthru
      _
    // Predicated region
    $region6: #{tpu_custom_call.1} parent=1 // pred_check
      _
    $region7: #{tpu_custom_call.1} parent=1 // pred_check_branch
      %23 = sbr.rel (0) target = $region9
    $region8: #{tpu_custom_call.1} parent=1 // pred_region
      _
    $region9: #{tpu_custom_call.1} parent=1 // pred_fallthru
      _
    // Predicated region
    $region10: #{tpu_custom_call.1} parent=1 // pred_check
      _
    $region11: #{tpu_custom_call.1} parent=1 // pred_check_branch
      %25 = sbr.rel (0) target = $region13
    $region12: #{tpu_custom_call.1} parent=1 // pred_region
      %26 = dma.done [#allocation3], 256
    $region13: #{tpu_custom_call.1} parent=1 // pred_fallthru
      _
    %p27 = scmp.eq.s32.totalorder 0, 0
    // Predicated region
    $region14: #{tpu_custom_call.1} parent=1 // pred_check
      %p28 = pneg %p27
    $region15: #{tpu_custom_call.1} parent=1 // pred_check_branch
      %30 = sbr.rel (%p28) target = $region17
    $region16: #{tpu_custom_call.1} parent=1 // pred_region
      %vm31 = vcmask 3072
      %32 = vst.msk [vmem:[%s2] sm:$0xf] %vm31, 0.0
      %33 = vst.msk [vmem:[%s3] sm:$0xf] %vm31, 0.0
    $region17: #{tpu_custom_call.1} parent=1 // pred_fallthru
      _
    %v34 = vld [vmem:[#allocation2] sm:$0xff]
    %v35 = vld [vmem:[#allocation2 + $0x8] sm:$0xff]
    %v36 = vld [vmem:[%s1] sm:$0xf]
    %38 = vset.pattern.permute.xlu0 0
    %39 = vperm.xlu0 %38, %v36
    %v40 = vpop.permute.xlu0 %39
    %v42 = vunpack.c.l.s4 839922192
    %v43 = vunpack.c.0.s8 %v42
    %v44 = vlaneseq
    %v45 = vshrl.u32 %v44, 7
    %v46 = vsub.s32 %v43, %v45
    %v47 = vrot.slane %v40, %v46
    %v49 = vsub.f32 %v34, %v47
    %v50 = vsub.f32 %v35, %v47
    %v51 = vld [vmem:[%s2] sm:$0xf]
    %v54 = vcombine.high %v49, %v49
    %v55 = vcombine.high %v50, %v50
    %vm58 = vcmask 1043456
    %v59 = vsel %vm58, %v49, 0.0
    %v60 = vsel %vm58, %v54, 0.0
    %v61 = vadd.f32 %v59, %v60
    %v62 = vsel %vm58, %v50, 0.0
    %v63 = vadd.f32 %v61, %v62
    %v64 = vsel %vm58, %v55, 0.0
    %v65 = vadd.f32 %v63, %v64
    %66 = vadd.xlane.f32.xlu0 %v65
    %v67 = vpop.xlane.xlu0 %66
    %v68 = vadd.f32 %v51, %v67
    %vm69 = vcmask 3072
    %70 = vst.msk [vmem:[%s2] sm:$0xf] %vm69, %v68
    %v71 = vld [vmem:[%s3] sm:$0xf]
    %v72 = vmul.f32 %v49, %v49
    %v73 = vmul.f32 %v50, %v50
    %v76 = vcombine.high %v72, %v72
    %v77 = vcombine.high %v73, %v73
    %v80 = vsel %vm58, %v72, 0.0
    %v81 = vsel %vm58, %v76, 0.0
    %v82 = vadd.f32 %v80, %v81
    %v83 = vsel %vm58, %v73, 0.0
    %v84 = vadd.f32 %v82, %v83
    %v85 = vsel %vm58, %v77, 0.0
    %v86 = vadd.f32 %v84, %v85
    %87 = vadd.xlane.f32.xlu0 %v86
    %v88 = vpop.xlane.xlu0 %87
    %v89 = vadd.f32 %v71, %v88
    %90 = vst.msk [vmem:[%s3] sm:$0xf] %vm69, %v89
    // Predicated region
    $region18: #{tpu_custom_call.1} parent=1 // pred_check
      _
    $region19: #{tpu_custom_call.1} parent=1 // pred_check_branch
      %92 = sbr.rel (0) target = $region21
    $region20: #{tpu_custom_call.1} parent=1 // pred_region
      _
    $region21: #{tpu_custom_call.1} parent=1 // pred_fallthru
      _
    // Predicated region
    $region22: #{tpu_custom_call.1} parent=1 // pred_check
      _
    $region23: #{tpu_custom_call.1} parent=1 // pred_check_branch
      %94 = sbr.rel (0) target = $region25
    $region24: #{tpu_custom_call.1} parent=1 // pred_region
      _
    $region25: #{tpu_custom_call.1} parent=1 // pred_fallthru
      _
    // Predicated region
    $region26: #{tpu_custom_call.1} parent=1 // pred_check
      _
    $region27: #{tpu_custom_call.1} parent=1 // pred_check_branch
      %96 = sbr.rel (0) target = $region29
    $region28: #{tpu_custom_call.1} parent=1 // pred_region
      _
    $region29: #{tpu_custom_call.1} parent=1 // pred_fallthru
      _
    // Predicated region
    $region30: #{tpu_custom_call.1} parent=1 // pred_check
      _
    $region31: #{tpu_custom_call.1} parent=1 // pred_check_branch
      %98 = sbr.rel (0) target = $region33
    $region32: #{tpu_custom_call.1} parent=1 // pred_region
      _
    $region33: #{tpu_custom_call.1} parent=1 // pred_fallthru
      _
    %99 = vsyncpa [#allocation3], 1

</llo_original>
